<compile_context>
chip_gen: v7x
topology: tpu7x:2x2x1
jax: 0.10.0
libtpu: 0.0.40
codegen_flags: <defaults>
</compile_context>

<pallas_src>
import math

import jax
import jax.numpy as jnp
from jax.experimental import pallas as pl
from jax.experimental.pallas import tpu as pltpu

# ---------------- config (small synthetic shapes consistent w/ the module) ---
BATCH = 2
N_VIEWS = 2
NUM_JOINTS = 25            # "25Joints"
IMG_H = IMG_W = 32         # stand-in for 512x512
FEAT_H = FEAT_W = 16       # backbone output resolution
VOL_SIZE = 8               # stand-in for 64^3 volume
CUBOID_SIDE = 250.0
VOLUME_MULTIPLIER = 1.0
VOLUME_SOFTMAX = True
VOLUME_AGGREGATION = "softmax"   # over views, as in the volumetric config
KIND = "coco"

assert VOLUME_AGGREGATION == "softmax"

JPAD = 32        # sublane-aligned padded joint channels inside unproject
TILE_M = 4096    # pixel tile for the fused conv matmul (review: 2048-4096)
TILE_VP = 256    # voxel tile (multiple of 128); raise to 512-1024 at Vp=64^3


# ---------------- Pallas kernel 1: patchified image -> joint heat (one dot) --
def _patch_head_kernel(x_ref, w_ref, b_ref, o_ref):
    # (J, 12) @ (12, tile_m) on the MXU; lane dim = pixels -> lane-dense loads
    # and stores, no padded channels.
    o_ref[...] = jnp.dot(w_ref[...], x_ref[...],
                         preferred_element_type=jnp.float32) + b_ref[...]


def patchify_head(x, w_t, b_col, *, tile_m=TILE_M):
    C, M = x.shape                     # (12, M) bf16
    J = w_t.shape[0]
    tm = min(tile_m, M)
    assert M % tm == 0 and tm % 128 == 0
    return pl.pallas_call(
        _patch_head_kernel,
        out_shape=jax.ShapeDtypeStruct((J, M), jnp.float32),
        grid=(M // tm,),
        in_specs=[pl.BlockSpec((C, tm), lambda i: (0, i)),
                  pl.BlockSpec((J, C), lambda i: (0, 0)),
                  pl.BlockSpec((J, 1), lambda i: (0, 0))],
        out_specs=pl.BlockSpec((J, tm), lambda i: (0, i)),
        compiler_params=pltpu.CompilerParams(
            dimension_semantics=("parallel",),
            vmem_limit_bytes=48 * 1024 * 1024),
    )(x, w_t, b_col)


# ---------------- Pallas kernel 2: unproject_heatmaps + fused V2V ------------
# Per (batch, voxel-tile) grid step: project the voxel tile with each view's
# 3x4 matrix (scalars from SMEM -> lane-dense VPU FMAs), bilinearly sample the
# heatmap with SEPARABLE one-hot factors (grid_sample align_corners=True, zero
# padding; invalid-depth voxels zeroed), softmax-aggregate across views online,
# apply the fused V2V 1x1x1 conv and store (J, tile_vp) lane-dense.
def _make_unproject_v2v_kernel(n_views, feat_h, feat_w, n_joints, jpad, tile_vp):

    def kernel(proj_ref, heat_ref, coord_ref, wv_ref, bv_ref, out_ref,
               tmp_ref, wxf_ref):
        b = pl.program_id(0)
        gx = coord_ref[0, 0:1, :]                               # (1, tile_vp)
        gy = coord_ref[0, 1:2, :]
        gz = coord_ref[0, 2:3, :]

        ky = jax.lax.broadcasted_iota(
            jnp.int32, (feat_h, tile_vp), 0).astype(jnp.float32)
        kx = jax.lax.broadcasted_iota(
            jnp.int32, (feat_w, tile_vp), 0).astype(jnp.float32)

        m_run = num = den = None
        for v in range(n_views):
            # projection matrix scalars from SMEM -> 9 lane-dense VPU FMAs
            base = (b * n_views + v) * 12
            p00 = proj_ref[base + 0];  p01 = proj_ref[base + 1]
            p02 = proj_ref[base + 2];  p03 = proj_ref[base + 3]
            p10 = proj_ref[base + 4];  p11 = proj_ref[base + 5]
            p12 = proj_ref[base + 6];  p13 = proj_ref[base + 7]
            p20 = proj_ref[base + 8];  p21 = proj_ref[base + 9]
            p22 = proj_ref[base + 10]; p23 = proj_ref[base + 11]

            px = p00 * gx + p01 * gy + p02 * gz + p03           # (1, tile_vp)
            py = p10 * gx + p11 * gy + p12 * gz + p13
            pz = p20 * gx + p21 * gy + p22 * gz + p23

            valid = (pz > 0.0).astype(jnp.float32)              # depth mask
            z_safe = jnp.where(pz == 0.0, 1.0, pz)
            x = px / z_safe
            y = py / z_safe

            # reference normalization (x/H, y/W — quirk of the original code,
            # symmetric because feat_h == feat_w) + align_corners=True unnorm.
            ix = (x / feat_h) * (feat_w - 1)
            iy = (y / feat_w) * (feat_h - 1)
            ix = jnp.clip(ix, -4.0, feat_w + 4.0)
            iy = jnp.clip(iy, -4.0, feat_h + 4.0)
            x0 = jnp.floor(ix); wx = ix - x0
            y0 = jnp.floor(iy); wy = iy - y0

            # separable one-hot bilinear factors, voxels on lanes; out-of-image
            # corners fall outside the iota range (-> zero padding); the depth
            # mask is folded into the y factor.
            wy_f = (jnp.where(ky == y0, 1.0 - wy, 0.0)
                    + jnp.where(ky == y0 + 1.0, wy, 0.0)) * valid  # (fh, tile_vp)
            wx_f = (jnp.where(kx == x0, 1.0 - wx, 0.0)
                    + jnp.where(kx == x0 + 1.0, wx, 0.0))          # (fw, tile_vp)
            wxf_ref[...] = wx_f

            # stage 1: contract the y factor on the MXU (bf16 ops, f32 acc)
            heat_v = heat_ref[0, v]                                # (fw*jpad, fh) bf16
            tmp_ref[...] = jnp.dot(heat_v, wy_f.astype(heat_v.dtype),
                                   preferred_element_type=jnp.float32)

            # stage 2: contract the x factor over 8-aligned sublane row-slices
            # of the VMEM scratch (bounded live ranges, no giant unroll).
            def s2_body(xi, acc):
                row = pl.multiple_of(xi * jpad, jpad)
                t = tmp_ref[pl.ds(row, jpad), :]                   # (jpad, tile_vp)
                w = wxf_ref[pl.ds(xi, 1), :]                       # (1, tile_vp)
                return acc + t * w

            val = jax.lax.fori_loop(
                0, feat_w, s2_body,
                jnp.zeros((jpad, tile_vp), jnp.float32))           # (jpad, tile_vp)

            # online softmax aggregation over views (constant accumulators);
            # zeroed invalid-depth voxels still participate, as in the reference.
            if v == 0:
                m_run, num, den = val, val, jnp.ones_like(val)
            else:
                m_new = jnp.maximum(m_run, val)
                s_old = jnp.exp(m_run - m_new)
                e = jnp.exp(val - m_new)
                num = num * s_old + val * e
                den = den * s_old + e
                m_run = m_new

        vol = num / den                                            # exact division

        # fused V2V 1x1x1 conv (Jpad_in -> J_out); output is (J, tile_vp)
        # -> lane-dense store, already in integrate's preferred layout.
        out = jnp.dot(wv_ref[...], vol, preferred_element_type=jnp.float32)
        out_ref[0] = out + bv_ref[...]

    return kernel


def unproject_and_v2v(proj_flat, heat_t, coords_t, w_v2v_p, b_v2v_c,
                      *, tile_vp=TILE_VP):
    B, NV, fwJ, fh = heat_t.shape
    J = w_v2v_p.shape[0]
    jpad = w_v2v_p.shape[1]
    fw = fwJ // jpad
    Vp = coords_t.shape[2]
    assert Vp % tile_vp == 0 and tile_vp % 128 == 0
    kernel = _make_unproject_v2v_kernel(NV, fh, fw, J, jpad, tile_vp)
    return pl.pallas_call(
        kernel,
        out_shape=jax.ShapeDtypeStruct((B, J, Vp), jnp.float32),
        grid=(B, Vp // tile_vp),                                   # B slow, tile fast
        in_specs=[
            pl.BlockSpec(memory_space=pltpu.MemorySpace.SMEM),     # proj (B*NV*12,)
            pl.BlockSpec((1, NV, fwJ, fh), lambda b, t: (b, 0, 0, 0)),  # const in t
            pl.BlockSpec((1, 3, tile_vp), lambda b, t: (b, 0, t)),
            pl.BlockSpec((J, jpad), lambda b, t: (0, 0)),          # w_v2v (padded)
            pl.BlockSpec((J, 1), lambda b, t: (0, 0)),             # b_v2v
        ],
        out_specs=pl.BlockSpec((1, J, tile_vp), lambda b, t: (b, 0, t)),
        scratch_shapes=[pltpu.VMEM((fw * jpad, tile_vp), jnp.float32),
                        pltpu.VMEM((fw, tile_vp), jnp.float32)],
        compiler_params=pltpu.CompilerParams(
            dimension_semantics=("parallel", "parallel"),
            vmem_limit_bytes=48 * 1024 * 1024),
    )(proj_flat, heat_t, coords_t, w_v2v_p, b_v2v_c)


# ---------------- Pallas kernel 3: integrate_tensor_3d_with_coordinates ------
# Tiled over the voxel axis ('arbitrary') so production 64^3 volumes fit VMEM.
# Pass 1: online softmax reduction -> 3D keypoints + per-joint (max, exp-sum).
# Pass 2: lane-dense normalized soft-volume writeback.
def _integrate_pass1_kernel(vol_ref, coord_ref, kp_ref, m_out_ref, l_out_ref,
                            m_ref, l_ref, num_ref):
    t = pl.program_id(1)

    @pl.when(t == 0)
    def _():
        m_ref[...] = jnp.full(m_ref.shape, -jnp.inf, jnp.float32)
        l_ref[...] = jnp.zeros(l_ref.shape, jnp.float32)
        num_ref[...] = jnp.zeros(num_ref.shape, jnp.float32)

    v = vol_ref[0] * VOLUME_MULTIPLIER                             # (J, tile_vp)
    c = coord_ref[0]                                               # (3, tile_vp)

    if VOLUME_SOFTMAX:
        m_new = jnp.maximum(m_ref[...], jnp.max(v, axis=1, keepdims=True))
        scale = jnp.exp(m_ref[...] - m_new)                        # (J, 1)
        e = jnp.exp(v - m_new)                                     # (J, tile_vp)
    else:
        m_new = jnp.zeros(m_ref.shape, jnp.float32)
        scale = jnp.ones(m_ref.shape, jnp.float32)
        e = jnp.maximum(v, 0.0)

    contrib = jax.lax.dot_general(                                 # (J, 3)
        e, c, (((1,), (1,)), ((), ())), preferred_element_type=jnp.float32)

    l_ref[...] = l_ref[...] * scale + jnp.sum(e, axis=1, keepdims=True)
    num_ref[...] = num_ref[...] * scale + contrib
    m_ref[...] = m_new

    @pl.when(t == pl.num_programs(1) - 1)
    def _():
        if VOLUME_SOFTMAX:
            kp_ref[0] = num_ref[...] / l_ref[...]                  # exact division
        else:
            kp_ref[0] = num_ref[...]
        m_out_ref[0] = m_ref[...]
        l_out_ref[0] = l_ref[...]


def integrate_pass1(volumes, coords_t, *, tile_vp=TILE_VP):
    B, J, Vp = volumes.shape
    assert Vp % tile_vp == 0
    return pl.pallas_call(
        _integrate_pass1_kernel,
        out_shape=(jax.ShapeDtypeStruct((B, J, 3), jnp.float32),
                   jax.ShapeDtypeStruct((B, J, 1), jnp.float32),
                   jax.ShapeDtypeStruct((B, J, 1), jnp.float32)),
        grid=(B, Vp // tile_vp),
        in_specs=[pl.BlockSpec((1, J, tile_vp), lambda b, t: (b, 0, t)),
                  pl.BlockSpec((1, 3, tile_vp), lambda b, t: (b, 0, t))],
        out_specs=(pl.BlockSpec((1, J, 3), lambda b, t: (b, 0, 0)),
                   pl.BlockSpec((1, J, 1), lambda b, t: (b, 0, 0)),
                   pl.BlockSpec((1, J, 1), lambda b, t: (b, 0, 0))),
        scratch_shapes=[pltpu.VMEM((J, 1), jnp.float32),
                        pltpu.VMEM((J, 1), jnp.float32),
                        pltpu.VMEM((J, 3), jnp.float32)],
        compiler_params=pltpu.CompilerParams(
            dimension_semantics=("parallel", "arbitrary"),
            vmem_limit_bytes=48 * 1024 * 1024),
    )(volumes, coords_t)


def _integrate_pass2_kernel(vol_ref, m_ref, l_ref, soft_ref):
    v = vol_ref[0] * VOLUME_MULTIPLIER
    if VOLUME_SOFTMAX:
        soft_ref[0] = jnp.exp(v - m_ref[0]) / l_ref[0]             # exact division
    else:
        soft_ref[0] = jnp.maximum(v, 0.0)


def integrate_pass2(volumes, m_stat, l_stat, *, tile_vp=TILE_VP):
    B, J, Vp = volumes.shape
    return pl.pallas_call(
        _integrate_pass2_kernel,
        out_shape=jax.ShapeDtypeStruct((B, J, Vp), jnp.float32),
        grid=(B, Vp // tile_vp),
        in_specs=[pl.BlockSpec((1, J, tile_vp), lambda b, t: (b, 0, t)),
                  pl.BlockSpec((1, J, 1), lambda b, t: (b, 0, 0)),
                  pl.BlockSpec((1, J, 1), lambda b, t: (b, 0, 0))],
        out_specs=pl.BlockSpec((1, J, tile_vp), lambda b, t: (b, 0, t)),
        compiler_params=pltpu.CompilerParams(
            dimension_semantics=("parallel", "parallel"),
            vmem_limit_bytes=48 * 1024 * 1024),
    )(volumes, m_stat, l_stat)


# ---------------- plain-JAX glue (coord volumes, cameras) --------------------
def build_coord_volumes(pred_keypoints_3d):
    sides = jnp.array([CUBOID_SIDE * 0.75, CUBOID_SIDE * 0.75, CUBOID_SIDE],
                      jnp.float32)
    idx = jnp.arange(VOL_SIZE, dtype=jnp.float32)
    xxx, yyy, zzz = jnp.meshgrid(idx, idx, idx, indexing="ij")
    grid = jnp.stack([xxx, yyy, zzz], axis=-1).reshape(-1, 3)       # (Vp, 3)

    coord_volumes, base_points, cuboids = [], [], []
    for b in range(BATCH):
        kp = pred_keypoints_3d[b]
        base_point = (kp[11, :3] + kp[12, :3]) / 2.0                # kind == 'coco'
        position = base_point - sides / 2.0
        grid_coord = position[None, :] + (sides / (VOL_SIZE - 1))[None, :] * grid
        coord_volume = grid_coord.reshape(VOL_SIZE, VOL_SIZE, VOL_SIZE, 3)
        # eval mode: theta = 0 -> rotation about [0, 1, 0] is the identity,
        # so (coord - center) @ R + center is a no-op.
        coord_volumes.append(coord_volume)
        base_points.append(base_point)
        cuboids.append({"position": position, "sides": sides})
    return jnp.stack(coord_volumes), jnp.stack(base_points), cuboids


def build_proj_matricies(base_points):
    # synthetic pinhole cameras; update_after_resize == scaling K by Hf/H, Wf/W
    f_full, c_full = 80.0, (IMG_W - 1) / 2.0
    sx, sy = FEAT_W / IMG_W, FEAT_H / IMG_H
    K = jnp.array([[f_full * sx, 0.0, c_full * sx],
                   [0.0, f_full * sy, c_full * sy],
                   [0.0, 0.0, 1.0]], jnp.float32)
    dist = 1200.0
    projs = []
    for b in range(BATCH):
        row = []
        for v in range(N_VIEWS):
            ang = (v - (N_VIEWS - 1) / 2.0) * 0.3
            c, s = math.cos(ang), math.sin(ang)
            R = jnp.array([[c, 0.0, s],
                           [0.0, 1.0, 0.0],
                           [-s, 0.0, c]], jnp.float32)
            t = jnp.array([0.0, 0.0, dist], jnp.float32) - R @ base_points[b]
            Rt = jnp.concatenate([R, t[:, None]], axis=1)           # (3, 4)
            row.append(K @ Rt)
        projs.append(jnp.stack(row))
    return jnp.stack(projs)                                         # (B, NV, 3, 4)


# ---------------- full forward (VolumetricTriangulationNet_25Joints_512x512) -
def forward(images, pred_keypoints_3d, params):
    B, NV = images.shape[:2]
    fh, fw, J = FEAT_H, FEAT_W, NUM_JOINTS
    M = B * NV * fh * fw
    Vp = VOL_SIZE ** 3

    # TODO(synk): the HRNet-W48 wholebody backbone is replaced by a stride-2
    # 2x2 patchify + linear projection; because this stand-in is linear, the
    # backbone(12->48) and head(48->J) convs collapse exactly into one matmul.
    w_comb = params["w_backbone"] @ params["w_head"]                # (12, J)
    b_comb = params["b_backbone"] @ params["w_head"] + params["b_head"]
    w_t = w_comb.T.astype(jnp.bfloat16)                             # (J, 12)
    b_col = b_comb.reshape(J, 1)

    # TODO(synk): the 2x2 patchify relayout could be folded into kernel 1 via
    # a strided index_map; kept as one channels-first (12, M) relayout here.
    x = images.reshape(B * NV, 3, fh, 2, fw, 2)
    x = x.transpose(1, 3, 5, 0, 2, 4).reshape(12, M).astype(jnp.bfloat16)

    heat_cf = patchify_head(x, w_t, b_col)                          # (J, M) f32

    heat5 = heat_cf.reshape(J, B, NV, fh, fw)
    features = heat5.transpose(1, 2, 0, 3, 4)                       # (B,NV,J,fh,fw)

    # heat for the unproject kernel: (B, NV, fw*JPAD, fh) bf16, joint axis
    # zero-padded 25->32 so the stage-2 sublane slices are 8-aligned.
    heat_pad = jnp.pad(heat5, ((0, JPAD - J), (0, 0), (0, 0), (0, 0), (0, 0)))
    heat_t = heat_pad.transpose(1, 2, 4, 0, 3).reshape(B, NV, fw * JPAD, fh)
    heat_t = heat_t.astype(jnp.bfloat16)

    coord_volumes, base_points, cuboids = build_coord_volumes(pred_keypoints_3d)
    proj_matricies = build_proj_matricies(base_points)
    proj_flat = proj_matricies.reshape(-1)                          # SMEM scalars

    # coords shipped (B, 3, Vp): lane-dense, no 42x padding of a (Vp, 3) tile.
    coords_t = coord_volumes.reshape(B, Vp, 3).transpose(0, 2, 1)

    # TODO(synk): V2VModel (3D conv hourglass) replaced by a single 1x1x1 3D
    # conv across joint channels, fused into the unproject kernel epilogue.
    w_v2v_p = jnp.pad(params["w_v2v"].T, ((0, 0), (0, JPAD - J)))   # (J, JPAD)
    b_v2v_c = params["b_v2v"].reshape(J, 1)

    volumes = unproject_and_v2v(proj_flat, heat_t, coords_t,
                                w_v2v_p, b_v2v_c)                   # (B, J, Vp)

    vol_keypoints_3d, m_stat, l_stat = integrate_pass1(volumes, coords_t)
    volumes_soft = integrate_pass2(volumes, m_stat, l_stat)
    volumes_soft = volumes_soft.reshape(B, J, VOL_SIZE, VOL_SIZE, VOL_SIZE)

    vol_confidences = None
    return (vol_keypoints_3d, features, volumes_soft, vol_confidences,
            cuboids, coord_volumes, base_points)


if __name__ == "__main__":
    key = jax.random.PRNGKey(0)
    k_img, k_kp, k1, k2, k3, k4, k5, k6 = jax.random.split(key, 8)
    images = jax.random.normal(k_img, (BATCH, N_VIEWS, 3, IMG_H, IMG_W),
                               jnp.float32)
    pred_keypoints_3d = 50.0 * jax.random.normal(k_kp, (BATCH, 17, 3), jnp.float32)
    params = {
        "w_backbone": 0.1 * jax.random.normal(k1, (12, 48), jnp.float32),
        "b_backbone": 0.01 * jax.random.normal(k2, (48,), jnp.float32),
        "w_head": 0.1 * jax.random.normal(k3, (48, NUM_JOINTS), jnp.float32),
        "b_head": 0.01 * jax.random.normal(k4, (NUM_JOINTS,), jnp.float32),
        "w_v2v": 0.1 * jax.random.normal(k5, (NUM_JOINTS, NUM_JOINTS), jnp.float32),
        "b_v2v": 0.01 * jax.random.normal(k6, (NUM_JOINTS,), jnp.float32),
    }

    outs = forward(images, pred_keypoints_3d, params)
    (vol_keypoints_3d, features, volumes, vol_conf,
     cuboids, coord_volumes, base_points) = outs
    jax.block_until_ready((vol_keypoints_3d, features, volumes,
                           coord_volumes, base_points))

    assert vol_keypoints_3d.shape == (BATCH, NUM_JOINTS, 3)
    assert features.shape == (BATCH, N_VIEWS, NUM_JOINTS, FEAT_H, FEAT_W)
    assert volumes.shape == (BATCH, NUM_JOINTS, VOL_SIZE, VOL_SIZE, VOL_SIZE)
    assert coord_volumes.shape == (BATCH, VOL_SIZE, VOL_SIZE, VOL_SIZE, 3)
    assert base_points.shape == (BATCH, 3)
    assert bool(jnp.all(jnp.isfinite(vol_keypoints_3d)))
    assert bool(jnp.all(jnp.isfinite(volumes)))
    if VOLUME_SOFTMAX:
        sums = volumes.reshape(BATCH, NUM_JOINTS, -1).sum(-1)
        assert bool(jnp.all(jnp.abs(sums - 1.0) < 1e-3))
    print("KERNEL_OK")
</pallas_src>

<mosaic_0001>
module attributes {stable_mosaic.version = 11 : i64} {
  func.func @_patch_head_kernel(%arg0: i32, %arg1: memref<12x1024xbf16, #tpu.memory_space<vmem>>, %arg2: memref<25x12xbf16, #tpu.memory_space<vmem>>, %arg3: memref<25x1xf32, #tpu.memory_space<vmem>>, %arg4: memref<25x1024xf32, #tpu.memory_space<vmem>>) attributes {dimension_semantics = [#tpu.dimension_semantics<parallel>], iteration_bounds = array<i64: 1>, scalar_prefetch = 0 : i64, scratch_operands = 0 : i64, tpu.core_type = #tpu.core_type<tc>, window_params = [{transform_indices = @transform_0, window_bounds = array<i64: 12, 1024>}, {pipeline_mode = #tpu.pipeline_mode<synchronous>, transform_indices = @transform_1, window_bounds = array<i64: 25, 12>}, {pipeline_mode = #tpu.pipeline_mode<synchronous>, transform_indices = @transform_2, window_bounds = array<i64: 25, 1>}, {transform_indices = @transform_3, window_bounds = array<i64: 25, 1024>}]} {
    %c0 = arith.constant 0 : index
    %c0_0 = arith.constant 0 : index
    %0 = vector.load %arg2[%c0, %c0_0] : memref<25x12xbf16, #tpu.memory_space<vmem>>, vector<25x12xbf16>
    %c0_1 = arith.constant 0 : index
    %c0_2 = arith.constant 0 : index
    %1 = vector.load %arg1[%c0_1, %c0_2] : memref<12x1024xbf16, #tpu.memory_space<vmem>>, vector<12x1024xbf16>
    %cst = arith.constant dense<0.000000e+00> : vector<25x1024xf32>
    %2 = tpu.matmul %0, %1, %cst {dimension_numbers = #tpu.dot_dimension_numbers<[1], [0], [0], [1], [0, 0, 1, 1], [], []>} : vector<25x12xbf16>, vector<12x1024xbf16>, vector<25x1024xf32> -> vector<25x1024xf32>
    %c0_3 = arith.constant 0 : index
    %c0_4 = arith.constant 0 : index
    %3 = vector.load %arg3[%c0_3, %c0_4] : memref<25x1xf32, #tpu.memory_space<vmem>>, vector<25x1xf32>
    %4 = vector.broadcast %3 : vector<25x1xf32> to vector<25x1024xf32>
    %5 = arith.addf %2, %4 : vector<25x1024xf32>
    %c0_5 = arith.constant 0 : index
    %c0_6 = arith.constant 0 : index
    %6 = vector.load %arg4[%c0_5, %c0_6] : memref<25x1024xf32, #tpu.memory_space<vmem>>, vector<25x1024xf32>
    tpu.vector_store %arg4[%c0_5, %c0_6], %5 {strides = array<i32>} : memref<25x1024xf32, #tpu.memory_space<vmem>>, vector<25x1024xf32>,
    return
  }
  func.func @transform_0(%arg0: i32) -> (i32, i32) {
    %c0_i32 = arith.constant 0 : i32
    %c0_i32_0 = arith.constant 0 : i32
    return %c0_i32, %arg0 : i32, i32
  }
  func.func @transform_1(%arg0: i32) -> (i32, i32) {
    %c0_i32 = arith.constant 0 : i32
    %c0_i32_0 = arith.constant 0 : i32
    %c0_i32_1 = arith.constant 0 : i32
    return %c0_i32, %c0_i32_0 : i32, i32
  }
  func.func @transform_2(%arg0: i32) -> (i32, i32) {
    %c0_i32 = arith.constant 0 : i32
    %c0_i32_0 = arith.constant 0 : i32
    %c0_i32_1 = arith.constant 0 : i32
    return %c0_i32, %c0_i32_0 : i32, i32
  }
  func.func @transform_3(%arg0: i32) -> (i32, i32) {
    %c0_i32 = arith.constant 0 : i32
    %c0_i32_0 = arith.constant 0 : i32
    return %c0_i32, %arg0 : i32, i32
  }
}

</mosaic_0001>

<llo_original>
// kernel: tpu_custom_call.1
$region0: #{tpu_custom_call.1}
  #allocation0 [shape = 'u32[]', space=smem, size = 0x4, offset = 0x4, fixed_abs, tag = 'smem constant byte address 0x4 - core index']
  #allocation1 [shape = 'u32[144,128]{1,0:T(1,128)}', space=vmem, size = 0x12000, scoped, tag = 'internal scratch']
  %s0 = inlined_call_operand.hbm [shape: bf16[12,1024], index: 0, kind: input, shape index: {}]
  %s1 = inlined_call_operand.vmem [shape: bf16[25,12], index: 1, kind: input, shape index: {}]
  %s2 = inlined_call_operand.vmem [shape: f32[25,1], index: 2, kind: input, shape index: {}]
  %s3 = inlined_call_operand.hbm [shape: f32[25,1024], index: 3, kind: output, shape index: {}]
  %s4 = sld [smem:[#allocation0]]
  $region26: #{tpu_custom_call.1} parent=0
    _
  %s6 = ssub.s32 1, %s4
  %s7 = scalar_select 0, %s6, %s4
  $region1: #{tpu_custom_call.1} parent=0
    #allocation2 [shape = 'u8[32768]{0}', space=vmem, size = 0x8000, scoped, tag = 'input window, operand 0, single buffered']
    #allocation3 [shape = 's32[1]{0}', space=sflag, size = 0x4, scoped, tag = 'scoped memory for tpu_custom_call.1']
    #allocation4 [shape = 's32[1]{0}', space=sflag, size = 0x4, scoped, tag = 'scoped memory for tpu_custom_call.1']
    #allocation5 [shape = 'u8[131072]{0}', space=vmem, size = 0x20000, scoped, tag = 'output window, operand 0, single buffered']
    %8 = vsyncpa [#allocation3], 0
    %9 = vsyncpa [#allocation4], 0
    // Predicated region
    $region2: #{tpu_custom_call.1} parent=1 // pred_check
      _
    $region3: #{tpu_custom_call.1} parent=1 // pred_check_branch
      %11 = sbr.rel (0) target = $region5
    $region4: #{tpu_custom_call.1} parent=1 // pred_region
      %s13 = ssub.s32 1024, 1024
      %14 = vsyncadd [#allocation3], %s13
      %s15 = sshll.u32 [#allocation2], 4
      %s16 = int_to_ptr.vmem [resolvable:$true] %s15
      %21 = dma.hbm_to_vmem [thread:$0]  %s0, 1024, %s16, [#allocation3], 512, 512, 32
    $region5: #{tpu_custom_call.1} parent=1 // pred_fallthru
      _
    // Predicated region
    $region6: #{tpu_custom_call.1} parent=1 // pred_check
      _
    $region7: #{tpu_custom_call.1} parent=1 // pred_check_branch
      %23 = sbr.rel (0) target = $region9
    $region8: #{tpu_custom_call.1} parent=1 // pred_region
      _
    $region9: #{tpu_custom_call.1} parent=1 // pred_fallthru
      _
    // Predicated region
    $region10: #{tpu_custom_call.1} parent=1 // pred_check
      _
    $region11: #{tpu_custom_call.1} parent=1 // pred_check_branch
      %25 = sbr.rel (0) target = $region13
    $region12: #{tpu_custom_call.1} parent=1 // pred_region
      _
    $region13: #{tpu_custom_call.1} parent=1 // pred_fallthru
      _
    // Predicated region
    $region14: #{tpu_custom_call.1} parent=1 // pred_check
      _
    $region15: #{tpu_custom_call.1} parent=1 // pred_check_branch
      %27 = sbr.rel (0) target = $region17
    $region16: #{tpu_custom_call.1} parent=1 // pred_region
      %28 = dma.done [#allocation3], 1024
    $region17: #{tpu_custom_call.1} parent=1 // pred_fallthru
      _
    %v30 = vld [vmem:[%s1] sm:$0xf]
    %v31 = vld [vmem:[%s1 + $0x4] sm:$0xf]
    %v32 = vld [vmem:[%s1 + $0x8] sm:$0xf]
    %v33 = vld [vmem:[%s1 + $0xc] sm:$0x1]
    %v34 = vld [vmem:[#allocation2] sm:$0xff]
    %v35 = vld [vmem:[#allocation2 + $0x8] sm:$0xff]
    %v36 = vld [vmem:[#allocation2 + $0x10] sm:$0xff]
    %v37 = vld [vmem:[#allocation2 + $0x18] sm:$0xff]
    %v38 = vld [vmem:[#allocation2 + $0x20] sm:$0x33]
    %v39 = vld [vmem:[#allocation2 + $0x28] sm:$0x33]
    %v40 = vld [vmem:[#allocation2 + $0x30] sm:$0x33]
    %v41 = vld [vmem:[#allocation2 + $0x38] sm:$0x33]
    %v42 = vld [vmem:[%s2] sm:$0xff]
    %v43 = vld [vmem:[%s2 + $0x8] sm:$0xff]
    %v44 = vld [vmem:[%s2 + $0x10] sm:$0xff]
    %v45 = vld [vmem:[%s2 + $0x18] sm:$0x1]
    %47 = vset.pattern.permute.xlu0 0
    %48 = vperm.xlu0 %47, %v42
    %v49 = vpop.permute.xlu0 %48
    %52 = vset.pattern.permute.xlu0 0
    %53 = vperm.xlu0 %52, %v43
    %v54 = vpop.permute.xlu0 %53
    %57 = vset.pattern.permute.xlu0 0
    %58 = vperm.xlu0 %57, %v44
    %v59 = vpop.permute.xlu0 %58
    %62 = vset.pattern.permute.xlu0 0
    %63 = vperm.xlu0 %62, %v45
    %v64 = vpop.permute.xlu0 %63
    %v70 = vunpack.c.l.b16 %v30
    %v71 = vunpack.c.l.b16 %v31
    %v72 = vunpack.c.l.b16 %v32
    %v73 = vunpack.c.l.b16 %v33
    %v74 = vpack.c.b16 %v71, %v70
    %v75 = vpack.c.b16 %v73, %v72
    %v84 = vunpack.c.l.b16 %v34
    %v85 = vunpack.c.h.b16 %v34
    %v86 = vunpack.c.l.b16 %v35
    %v87 = vunpack.c.h.b16 %v35
    %v88 = vunpack.c.l.b16 %v36
    %v89 = vunpack.c.h.b16 %v36
    %v90 = vunpack.c.l.b16 %v37
    %v91 = vunpack.c.h.b16 %v37
    %v92 = vunpack.c.l.b16 %v38
    %v93 = vunpack.c.h.b16 %v38
    %v94 = vunpack.c.l.b16 %v39
    %v95 = vunpack.c.h.b16 %v39
    %v96 = vunpack.c.l.b16 %v40
    %v97 = vunpack.c.h.b16 %v40
    %v98 = vunpack.c.l.b16 %v41
    %v99 = vunpack.c.h.b16 %v41
    %v100 = vpack.c.b16 %v92, %v84
    %v101 = vpack.c.b16 %v93, %v85
    %v102 = vpack.c.b16 %v94, %v86
    %v103 = vpack.c.b16 %v95, %v87
    %v104 = vpack.c.b16 %v96, %v88
    %v105 = vpack.c.b16 %v97, %v89
    %v106 = vpack.c.b16 %v98, %v90
    %v107 = vpack.c.b16 %v99, %v91
    %vm108 = vcmask 97280
    %v110 = vsel %vm108, %v74, 0
    %v113 = vsel %vm108, %v75, 0
    %vm115 = vcmask 1045504
    %v117 = vsel %vm115, %v100, 0
    %v120 = vsel %vm115, %v101, 0
    %v123 = vsel %vm115, %v102, 0
    %v126 = vsel %vm115, %v103, 0
    %v129 = vsel %vm115, %v104, 0
    %v132 = vsel %vm115, %v105, 0
    %v135 = vsel %vm115, %v106, 0
    %v138 = vsel %vm115, %v107, 0
    %140 = vmatprep.subr.bf16.mxu0 %v120
    %141 = vmatpush1.bf16.msra.mxu0 %v117
    %142 = vmatprep.subr.bf16.mxu0 0
    %143 = vmatpush1.bf16.msra.mxu0 0
    %144 = vmatprep.subr.bf16.mxu0 0
    %145 = vmatpush1.bf16.msra.mxu0 0
    %146 = vmatprep.subr.bf16.mxu0 0
    %147 = vmatpush1.bf16.msra.mxu0 0
    %148 = vmatprep.subr.bf16.mxu0 0
    %149 = vmatpush1.bf16.msra.mxu0 0
    %150 = vmatprep.subr.bf16.mxu0 0
    %151 = vmatpush1.bf16.msra.mxu0 0
    %152 = vmatprep.subr.bf16.mxu0 0
    %153 = vmatpush1.bf16.msra.mxu0 0
    %154 = vmatprep.subr.bf16.mxu0 0
    %155 = vmatpush1.bf16.msra.mxu0 0
    %156 = vmatprep.subr.bf16.mxu0 0
    %157 = vmatpush1.bf16.msra.mxu0 0
    %158 = vmatprep.subr.bf16.mxu0 0
    %159 = vmatpush1.bf16.msra.mxu0 0
    %160 = vmatprep.subr.bf16.mxu0 0
    %161 = vmatpush1.bf16.msra.mxu0 0
    %162 = vmatprep.subr.bf16.mxu0 0
    %163 = vmatpush1.bf16.msra.mxu0 0
    %164 = vmatprep.subr.bf16.mxu0 0
    %165 = vmatpush1.bf16.msra.mxu0 0
    %166 = vmatprep.subr.bf16.mxu0 0
    %167 = vmatpush1.bf16.msra.mxu0 0
    %168 = vmatprep.subr.bf16.mxu0 0
    %169 = vmatpush1.bf16.msra.mxu0 0
    %170 = vmatprep.subr.bf16.mxu0 0
    %171 = vmatpush1.bf16.msra.mxu0 0
    %172 = vmatprep.mubr.bf16.mxu0 0
    %173 = vmatmul.mubr.bf16.gmra.mrb[0].mxu0 %v110
    %v174 = vpop.f32.mrb[0].mxu0
    %v175 = vadd.f32 %v49, %v174
    %v176 = vpop.f32.mrb[0].mxu0
    %v177 = vadd.f32 %v49, %v176
    %v178 = vpop.f32.mrb[0].mxu0
    %v179 = vadd.f32 %v54, %v178
    %v180 = vpop.f32.mrb[0].mxu0
    %v181 = vadd.f32 %v54, %v180
    %182 = vmatprep.mubr.bf16.mxu0 0
    %183 = vmatmul.mubr.bf16.gmra.mrb[0].mxu0 %v113
    %v184 = vpop.f32.mrb[0].mxu0
    %v185 = vadd.f32 %v59, %v184
    %v186 = vpop.f32.mrb[0].mxu0
    %v187 = vadd.f32 %v59, %v186
    %v188 = vpop.f32.mrb[0].mxu0
    %v189 = vadd.f32 %v64, %v188
    %v190 = vpop.f32.mrb[0].mxu0
    %v191 = vadd.f32 %v64, %v190
    %192 = vdwg.mxu0
    %193 = vmatprep.subr.bf16.mxu0 %v126
    %194 = vmatpush1.bf16.msra.mxu0 %v123
    %195 = vmatprep.subr.bf16.mxu0 0
    %196 = vmatpush1.bf16.msra.mxu0 0
    %197 = vmatprep.subr.bf16.mxu0 0
    %198 = vmatpush1.bf16.msra.mxu0 0
    %199 = vmatprep.subr.bf16.mxu0 0
    %200 = vmatpush1.bf16.msra.mxu0 0
    %201 = vmatprep.subr.bf16.mxu0 0
    %202 = vmatpush1.bf16.msra.mxu0 0
    %203 = vmatprep.subr.bf16.mxu0 0
    %204 = vmatpush1.bf16.msra.mxu0 0
    %205 = vmatprep.subr.bf16.mxu0 0
    %206 = vmatpush1.bf16.msra.mxu0 0
    %207 = vmatprep.subr.bf16.mxu0 0
    %208 = vmatpush1.bf16.msra.mxu0 0
    %209 = vmatprep.subr.bf16.mxu0 0
    %210 = vmatpush1.bf16.msra.mxu0 0
    %211 = vmatprep.subr.bf16.mxu0 0
    %212 = vmatpush1.bf16.msra.mxu0 0
    %213 = vmatprep.subr.bf16.mxu0 0
    %214 = vmatpush1.bf16.msra.mxu0 0
    %215 = vmatprep.subr.bf16.mxu0 0
    %216 = vmatpush1.bf16.msra.mxu0 0
    %217 = vmatprep.subr.bf16.mxu0 0
    %218 = vmatpush1.bf16.msra.mxu0 0
    %219 = vmatprep.subr.bf16.mxu0 0
    %220 = vmatpush1.bf16.msra.mxu0 0
    %221 = vmatprep.subr.bf16.mxu0 0
    %222 = vmatpush1.bf16.msra.mxu0 0
    %223 = vmatprep.subr.bf16.mxu0 0
    %224 = vmatpush1.bf16.msra.mxu0 0
    %225 = vmatprep.mubr.bf16.mxu0 0
    %226 = vmatmul.mubr.bf16.gmra.mrb[0].mxu0 %v110
    %v227 = vpop.f32.mrb[0].mxu0
    %v228 = vadd.f32 %v49, %v227
    %v229 = vpop.f32.mrb[0].mxu0
    %v230 = vadd.f32 %v49, %v229
    %v231 = vpop.f32.mrb[0].mxu0
    %v232 = vadd.f32 %v54, %v231
    %v233 = vpop.f32.mrb[0].mxu0
    %v234 = vadd.f32 %v54, %v233
    %235 = vmatprep.mubr.bf16.mxu0 0
    %236 = vmatmul.mubr.bf16.gmra.mrb[0].mxu0 %v113
    %v237 = vpop.f32.mrb[0].mxu0
    %v238 = vadd.f32 %v59, %v237
    %v239 = vpop.f32.mrb[0].mxu0
    %v240 = vadd.f32 %v59, %v239
    %v241 = vpop.f32.mrb[0].mxu0
    %v242 = vadd.f32 %v64, %v241
    %v243 = vpop.f32.mrb[0].mxu0
    %v244 = vadd.f32 %v64, %v243
    %245 = vdwg.mxu0
    %246 = vmatprep.subr.bf16.mxu0 %v132
    %247 = vmatpush1.bf16.msra.mxu0 %v129
    %248 = vmatprep.subr.bf16.mxu0 0
    %249 = vmatpush1.bf16.msra.mxu0 0
    %250 = vmatprep.subr.bf16.mxu0 0
    %251 = vmatpush1.bf16.msra.mxu0 0
    %252 = vmatprep.subr.bf16.mxu0 0
    %253 = vmatpush1.bf16.msra.mxu0 0
    %254 = vmatprep.subr.bf16.mxu0 0
    %255 = vmatpush1.bf16.msra.mxu0 0
    %256 = vmatprep.subr.bf16.mxu0 0
    %257 = vmatpush1.bf16.msra.mxu0 0
    %258 = vmatprep.subr.bf16.mxu0 0
    %259 = vmatpush1.bf16.msra.mxu0 0
    %260 = vmatprep.subr.bf16.mxu0 0
    %261 = vmatpush1.bf16.msra.mxu0 0
    %262 = vmatprep.subr.bf16.mxu0 0
    %263 = vmatpush1.bf16.msra.mxu0 0
    %264 = vmatprep.subr.bf16.mxu0 0
    %265 = vmatpush1.bf16.msra.mxu0 0
    %266 = vmatprep.subr.bf16.mxu0 0
    %267 = vmatpush1.bf16.msra.mxu0 0
    %268 = vmatprep.subr.bf16.mxu0 0
    %269 = vmatpush1.bf16.msra.mxu0 0
    %270 = vmatprep.subr.bf16.mxu0 0
    %271 = vmatpush1.bf16.msra.mxu0 0
    %272 = vmatprep.subr.bf16.mxu0 0
    %273 = vmatpush1.bf16.msra.mxu0 0
    %274 = vmatprep.subr.bf16.mxu0 0
    %275 = vmatpush1.bf16.msra.mxu0 0
    %276 = vmatprep.subr.bf16.mxu0 0
    %277 = vmatpush1.bf16.msra.mxu0 0
    %278 = vmatprep.mubr.bf16.mxu0 0
    %279 = vmatmul.mubr.bf16.gmra.mrb[0].mxu0 %v110
    %v280 = vpop.f32.mrb[0].mxu0
    %v281 = vadd.f32 %v49, %v280
    %v282 = vpop.f32.mrb[0].mxu0
    %v283 = vadd.f32 %v49, %v282
    %v284 = vpop.f32.mrb[0].mxu0
    %v285 = vadd.f32 %v54, %v284
    %v286 = vpop.f32.mrb[0].mxu0
    %v287 = vadd.f32 %v54, %v286
    %288 = vmatprep.mubr.bf16.mxu0 0
    %289 = vmatmul.mubr.bf16.gmra.mrb[0].mxu0 %v113
    %v290 = vpop.f32.mrb[0].mxu0
    %v291 = vadd.f32 %v59, %v290
    %v292 = vpop.f32.mrb[0].mxu0
    %v293 = vadd.f32 %v59, %v292
    %v294 = vpop.f32.mrb[0].mxu0
    %v295 = vadd.f32 %v64, %v294
    %v296 = vpop.f32.mrb[0].mxu0
    %v297 = vadd.f32 %v64, %v296
    %298 = vdwg.mxu0
    %299 = vmatprep.subr.bf16.mxu0 %v138
    %300 = vmatpush1.bf16.msra.mxu0 %v135
    %301 = vmatprep.subr.bf16.mxu0 0
    %302 = vmatpush1.bf16.msra.mxu0 0
    %303 = vmatprep.subr.bf16.mxu0 0
    %304 = vmatpush1.bf16.msra.mxu0 0
    %305 = vmatprep.subr.bf16.mxu0 0
    %306 = vmatpush1.bf16.msra.mxu0 0
    %307 = vmatprep.subr.bf16.mxu0 0
    %308 = vmatpush1.bf16.msra.mxu0 0
    %309 = vmatprep.subr.bf16.mxu0 0
    %310 = vmatpush1.bf16.msra.mxu0 0
    %311 = vmatprep.subr.bf16.mxu0 0
    %312 = vmatpush1.bf16.msra.mxu0 0
    %313 = vmatprep.subr.bf16.mxu0 0
    %314 = vmatpush1.bf16.msra.mxu0 0
    %315 = vmatprep.subr.bf16.mxu0 0
    %316 = vmatpush1.bf16.msra.mxu0 0
    %317 = vmatprep.subr.bf16.mxu0 0
    %318 = vmatpush1.bf16.msra.mxu0 0
    %319 = vmatprep.subr.bf16.mxu0 0
    %320 = vmatpush1.bf16.msra.mxu0 0
    %321 = vmatprep.subr.bf16.mxu0 0
    %322 = vmatpush1.bf16.msra.mxu0 0
    %323 = vmatprep.subr.bf16.mxu0 0
    %324 = vmatpush1.bf16.msra.mxu0 0
    %325 = vmatprep.subr.bf16.mxu0 0
    %326 = vmatpush1.bf16.msra.mxu0 0
    %327 = vmatprep.subr.bf16.mxu0 0
    %328 = vmatpush1.bf16.msra.mxu0 0
    %329 = vmatprep.subr.bf16.mxu0 0
    %330 = vmatpush1.bf16.msra.mxu0 0
    %331 = vmatprep.mubr.bf16.mxu0 0
    %332 = vmatmul.mubr.bf16.gmra.mrb[0].mxu0 %v110
    %v333 = vpop.f32.mrb[0].mxu0
    %v334 = vadd.f32 %v49, %v333
    %v335 = vpop.f32.mrb[0].mxu0
    %v336 = vadd.f32 %v49, %v335
    %v337 = vpop.f32.mrb[0].mxu0
    %v338 = vadd.f32 %v54, %v337
    %v339 = vpop.f32.mrb[0].mxu0
    %v340 = vadd.f32 %v54, %v339
    %341 = vmatprep.mubr.bf16.mxu0 0
    %342 = vmatmul.mubr.bf16.gmra.mrb[0].mxu0 %v113
    %v343 = vpop.f32.mrb[0].mxu0
    %v344 = vadd.f32 %v59, %v343
    %v345 = vpop.f32.mrb[0].mxu0
    %v346 = vadd.f32 %v59, %v345
    %v347 = vpop.f32.mrb[0].mxu0
    %v348 = vadd.f32 %v64, %v347
    %v349 = vpop.f32.mrb[0].mxu0
    %v350 = vadd.f32 %v64, %v349
    %351 = vdwg.mxu0
    %352 = vst [vmem:[#allocation5] sm:$0xff] %v175
    %353 = vst [vmem:[#allocation5 + $0x8] sm:$0xff] %v177
    %354 = vst [vmem:[#allocation5 + $0x10] sm:$0xff] %v228
    %355 = vst [vmem:[#allocation5 + $0x18] sm:$0xff] %v230
    %356 = vst [vmem:[#allocation5 + $0x20] sm:$0xff] %v281
    %357 = vst [vmem:[#allocation5 + $0x28] sm:$0xff] %v283
    %358 = vst [vmem:[#allocation5 + $0x30] sm:$0xff] %v334
    %359 = vst [vmem:[#allocation5 + $0x38] sm:$0xff] %v336
    %360 = vst [vmem:[#allocation5 + $0x40] sm:$0xff] %v179
    %361 = vst [vmem:[#allocation5 + $0x48] sm:$0xff] %v181
    %362 = vst [vmem:[#allocation5 + $0x50] sm:$0xff] %v232
    %363 = vst [vmem:[#allocation5 + $0x58] sm:$0xff] %v234
    %364 = vst [vmem:[#allocation5 + $0x60] sm:$0xff] %v285
    %365 = vst [vmem:[#allocation5 + $0x68] sm:$0xff] %v287
    %366 = vst [vmem:[#allocation5 + $0x70] sm:$0xff] %v338
    %367 = vst [vmem:[#allocation5 + $0x78] sm:$0xff] %v340
    %368 = vst [vmem:[#allocation5 + $0x80] sm:$0xff] %v185
    %369 = vst [vmem:[#allocation5 + $0x88] sm:$0xff] %v187
    %370 = vst [vmem:[#allocation5 + $0x90] sm:$0xff] %v238
    %371 = vst [vmem:[#allocation5 + $0x98] sm:$0xff] %v240
    %372 = vst [vmem:[#allocation5 + $0xa0] sm:$0xff] %v291
    %373 = vst [vmem:[#allocation5 + $0xa8] sm:$0xff] %v293
    %374 = vst [vmem:[#allocation5 + $0xb0] sm:$0xff] %v344
    %375 = vst [vmem:[#allocation5 + $0xb8] sm:$0xff] %v346
    %376 = vst [vmem:[#allocation5 + $0xc0] sm:$0x1] %v189
    %377 = vst [vmem:[#allocation5 + $0xc8] sm:$0x1] %v191
    %378 = vst [vmem:[#allocation5 + $0xd0] sm:$0x1] %v242
    %379 = vst [vmem:[#allocation5 + $0xd8] sm:$0x1] %v244
    %380 = vst [vmem:[#allocation5 + $0xe0] sm:$0x1] %v295
    %381 = vst [vmem:[#allocation5 + $0xe8] sm:$0x1] %v297
    %382 = vst [vmem:[#allocation5 + $0xf0] sm:$0x1] %v348
    %383 = vst [vmem:[#allocation5 + $0xf8] sm:$0x1] %v350
    // Predicated region
    $region18: #{tpu_custom_call.1} parent=1 // pred_check
      _
    $region19: #{tpu_custom_call.1} parent=1 // pred_check_branch
      %385 = sbr.rel (0) target = $region21
    $region20: #{tpu_custom_call.1} parent=1 // pred_region
      %s387 = ssub.s32 4096, 4096
      %388 = vsyncadd [#allocation4], %s387
      %s389 = sshll.u32 [#allocation5], 4
      %s390 = int_to_ptr.vmem [resolvable:$true] %s389
      %395 = dma.vmem_to_hbm [thread:$0]  %s390, 4096, %s3, [#allocation4], 1024, 1024, 64
    $region21: #{tpu_custom_call.1} parent=1 // pred_fallthru
      _
    // Predicated region
    $region22: #{tpu_custom_call.1} parent=1 // pred_check
      _
    $region23: #{tpu_custom_call.1} parent=1 // pred_check_branch
      %397 = sbr.rel (0) target = $region25
    $region24: #{tpu_custom_call.1} parent=1 // pred_region
      %398 = dma.done [#allocation4], 4096
    $region25: #{tpu_custom_call.1} parent=1 // pred_fallthru
      _
    %399 = vsyncpa [#allocation3], 1
    %400 = vsyncpa [#allocation4], 1

</llo_original>
